<compile_context>
chip_gen: v6e
topology: v6e:2x2x1
jax: 0.10.0
libtpu: 0.0.40
codegen_flags: <defaults>
</compile_context>

<pallas_src>
import jax
import jax.numpy as jnp
from jax.experimental import pallas as pl
from jax.experimental.pallas import tpu as pltpu

BN_EPS = 1e-5
LANE = 128


def _gnn_kernel(x_ref, adj_ref,
                w1_ref, w2_ref, w3_ref,
                g1_ref, b1_ref, g2_ref, b2_ref, g3_ref, b3_ref,
                out_ref):
    B, N, _ = adj_ref.shape

    adj = adj_ref[...]                                     # [B, N, N] f32

    # --- adj_hat: diagonal forced to 1 (add_loop=True, improved=False) -----
    row = jax.lax.broadcasted_iota(jnp.int32, (N, N), 0)
    col = jax.lax.broadcasted_iota(jnp.int32, (N, N), 1)
    eye = (row == col)[None, :, :]
    adj_hat = jnp.where(eye, 1.0, adj)

    # --- normalized adjacency D^-1/2 A_hat D^-1/2, computed once (f32 math),
    #     stored bf16, reused by all three layers ---------------------------
    deg = jnp.maximum(jnp.sum(adj_hat, axis=-1), 1.0)      # clamp(min=1) [B,N]
    dis = jax.lax.rsqrt(deg)                               # [B, N] f32
    adj_n = (adj_hat * dis[:, :, None] * dis[:, None, :]).astype(jnp.bfloat16)

    inv_bn = 1.0 / float(B * N)

    def layer(h, w_ref, g_ref, b_ref):
        c_in = h.shape[-1]
        d = w_ref.shape[-1]
        # --- linear (no bias): flatten batch*node rows into one 2D matmul ---
        h2 = h.reshape(B * N, c_in).astype(jnp.bfloat16)
        h2 = jnp.dot(h2, w_ref[...].astype(jnp.bfloat16),
                     preferred_element_type=jnp.float32)
        h = h2.reshape(B, N, d)
        # --- propagation with the pre-normalized adjacency ------------------
        h = jnp.einsum('bmn,bnd->bmd', adj_n, h.astype(jnp.bfloat16),
                       preferred_element_type=jnp.float32)
        # --- ReLU ------------------------------------------------------------
        h = jnp.maximum(h, 0.0)
        # --- BatchNorm1d (train mode): fused sum / sum-of-squares pass, then
        #     affine folded into a single per-channel scale/shift FMA ---------
        s = jnp.sum(h, axis=(0, 1), keepdims=True)          # [1, 1, C]
        ss = jnp.sum(h * h, axis=(0, 1), keepdims=True)
        mean = s * inv_bn
        var = jnp.maximum(ss * inv_bn - mean * mean, 0.0)    # biased variance
        gamma = g_ref[...][None, :, :]
        beta = b_ref[...][None, :, :]
        scale = gamma * jax.lax.rsqrt(var + BN_EPS)
        shift = beta - mean * scale
        return h * scale + shift

    h = layer(x_ref[...], w1_ref, g1_ref, b1_ref)
    h = layer(h, w2_ref, g2_ref, b2_ref)
    h = layer(h, w3_ref, g3_ref, b3_ref)
    out_ref[...] = h.astype(out_ref.dtype)


def _pad_last(a, target):
    pad = target - a.shape[-1]
    if pad == 0:
        return a
    widths = [(0, 0)] * (a.ndim - 1) + [(0, pad)]
    return jnp.pad(a, widths)


def _pad2(w, rows, cols):
    return jnp.pad(w, ((0, rows - w.shape[0]), (0, cols - w.shape[1])))


def gnn_forward(x, adj, params):
    """x: [B, N, C_in] float32, adj: [B, N, N] float32 -> [B, N, C_out]."""
    B, N, c_in = x.shape
    hid = params['w1'].shape[1]
    c_out = params['w3'].shape[1]

    # Lane-dense padding of every channel dim up to a multiple of 128.
    cpad = lambda c: ((c + LANE - 1) // LANE) * LANE
    p_in, p_hid, p_out = cpad(c_in), cpad(hid), cpad(c_out)

    operands = (
        _pad_last(x, p_in), adj,
        _pad2(params['w1'], p_in, p_hid),
        _pad2(params['w2'], p_hid, p_hid),
        _pad2(params['w3'], p_hid, p_out),
        _pad_last(params['g1'], p_hid), _pad_last(params['b1'], p_hid),
        _pad_last(params['g2'], p_hid), _pad_last(params['b2'], p_hid),
        _pad_last(params['g3'], p_out), _pad_last(params['b3'], p_out),
    )

    vmem = pl.BlockSpec(memory_space=pltpu.MemorySpace.VMEM)
    # TODO(synk): for very large DiffPool batches, grid over B with
    # dimension_semantics=("parallel",) plus cross-grid sum/sumsq scratch
    # accumulators for the BatchNorm statistics (two-pass normalize).
    out_p = pl.pallas_call(
        _gnn_kernel,
        out_shape=jax.ShapeDtypeStruct((B, N, p_out), jnp.float32),
        in_specs=[vmem] * len(operands),
        out_specs=vmem,
    )(*operands)
    return out_p[:, :, :c_out]


def init_params(key, in_channels, hidden_channels, out_channels):
    k1, k2, k3 = jax.random.split(key, 3)

    def glorot(k, fan_in, fan_out):
        scale = jnp.sqrt(6.0 / (fan_in + fan_out))
        return jax.random.uniform(k, (fan_in, fan_out), jnp.float32,
                                  -scale, scale)

    # Linear weights stored as (in, out) so that h = x @ W matches torch.
    return {
        'w1': glorot(k1, in_channels, hidden_channels),
        'w2': glorot(k2, hidden_channels, hidden_channels),
        'w3': glorot(k3, hidden_channels, out_channels),
        # BatchNorm1d defaults: gamma = 1, beta = 0 (kept as (1, C)).
        'g1': jnp.ones((1, hidden_channels), jnp.float32),
        'b1': jnp.zeros((1, hidden_channels), jnp.float32),
        'g2': jnp.ones((1, hidden_channels), jnp.float32),
        'b2': jnp.zeros((1, hidden_channels), jnp.float32),
        'g3': jnp.ones((1, out_channels), jnp.float32),
        'b3': jnp.zeros((1, out_channels), jnp.float32),
    }


if __name__ == "__main__":
    B, N = 2, 16
    in_channels, hidden_channels, out_channels = 4, 32, 8

    key = jax.random.PRNGKey(0)
    kx, ka, kp = jax.random.split(key, 3)

    x = jax.random.normal(kx, (B, N, in_channels), jnp.float32)
    # symmetric 0/1 adjacency (no self loops; kernel adds them)
    a = jax.random.uniform(ka, (B, N, N), jnp.float32)
    adj = (a + jnp.swapaxes(a, 1, 2) > 1.0).astype(jnp.float32)
    adj = adj * (1.0 - jnp.eye(N, dtype=jnp.float32))[None]

    params = init_params(kp, in_channels, hidden_channels, out_channels)

    out = gnn_forward(x, adj, params)
    jax.block_until_ready(out)
    assert out.shape == (B, N, out_channels)
    assert bool(jnp.all(jnp.isfinite(out)))
    print("KERNEL_OK")
</pallas_src>

<mosaic_0001>
module attributes {stable_mosaic.version = 11 : i64} {
  func.func @_gnn_kernel(%arg0: memref<2x16x128xf32, #tpu.memory_space<vmem>>, %arg1: memref<2x16x16xf32, #tpu.memory_space<vmem>>, %arg2: memref<128x128xf32, #tpu.memory_space<vmem>>, %arg3: memref<128x128xf32, #tpu.memory_space<vmem>>, %arg4: memref<128x128xf32, #tpu.memory_space<vmem>>, %arg5: memref<1x128xf32, #tpu.memory_space<vmem>>, %arg6: memref<1x128xf32, #tpu.memory_space<vmem>>, %arg7: memref<1x128xf32, #tpu.memory_space<vmem>>, %arg8: memref<1x128xf32, #tpu.memory_space<vmem>>, %arg9: memref<1x128xf32, #tpu.memory_space<vmem>>, %arg10: memref<1x128xf32, #tpu.memory_space<vmem>>, %arg11: memref<2x16x128xf32, #tpu.memory_space<vmem>>) attributes {dimension_semantics = [], scalar_prefetch = 0 : i64, scratch_operands = 0 : i64, tpu.core_type = #tpu.core_type<tc>} {
    %c0 = arith.constant 0 : index
    %c0_0 = arith.constant 0 : index
    %c0_1 = arith.constant 0 : index
    %0 = vector.load %arg1[%c0, %c0_0, %c0_1] : memref<2x16x16xf32, #tpu.memory_space<vmem>>, vector<2x16x16xf32>
    %1 = tpu.iota {dimensions = array<i32: 0>} : vector<16x16xi32>
    %2 = tpu.iota {dimensions = array<i32: 1>} : vector<16x16xi32>
    %3 = arith.cmpi eq, %1, %2 : vector<16x16xi32>
    %4 = vector.shape_cast %3 : vector<16x16xi1> to vector<1x16x16xi1>
    %cst = arith.constant 1.000000e+00 : f32
    %5 = vector.shape_cast %4 : vector<1x16x16xi1> to vector<1x16x16xi1>
    %6 = vector.broadcast %5 : vector<1x16x16xi1> to vector<2x16x16xi1>
    %7 = vector.broadcast %cst : f32 to vector<2x16x16xf32>
    %8 = arith.select %6, %7, %0 : vector<2x16x16xi1>, vector<2x16x16xf32>
    %cst_2 = arith.constant dense<0.000000e+00> : vector<2x16xf32>
    %9 = vector.multi_reduction <add>, %8, %cst_2 [2] : vector<2x16x16xf32> to vector<2x16xf32>
    %cst_3 = arith.constant 1.000000e+00 : f32
    %10 = vector.broadcast %cst_3 : f32 to vector<2x16xf32>
    %11 = arith.maximumf %9, %10 : vector<2x16xf32>
    %12 = math.rsqrt %11 : vector<2x16xf32>
    %13 = vector.shape_cast %12 : vector<2x16xf32> to vector<2x16x1xf32>
    %14 = vector.broadcast %13 : vector<2x16x1xf32> to vector<2x16x16xf32>
    %15 = arith.mulf %8, %14 : vector<2x16x16xf32>
    %16 = vector.shape_cast %12 : vector<2x16xf32> to vector<2x1x16xf32>
    %17 = vector.broadcast %16 : vector<2x1x16xf32> to vector<2x16x16xf32>
    %18 = arith.mulf %15, %17 : vector<2x16x16xf32>
    %19 = arith.truncf %18 : vector<2x16x16xf32> to vector<2x16x16xbf16>
    %c0_4 = arith.constant 0 : index
    %c0_5 = arith.constant 0 : index
    %c0_6 = arith.constant 0 : index
    %20 = vector.load %arg0[%c0_4, %c0_5, %c0_6] : memref<2x16x128xf32, #tpu.memory_space<vmem>>, vector<2x16x128xf32>
    %21 = vector.shape_cast %20 : vector<2x16x128xf32> to vector<32x128xf32>
    %22 = arith.truncf %21 : vector<32x128xf32> to vector<32x128xbf16>
    %c0_7 = arith.constant 0 : index
    %c0_8 = arith.constant 0 : index
    %23 = vector.load %arg2[%c0_7, %c0_8] : memref<128x128xf32, #tpu.memory_space<vmem>>, vector<128x128xf32>
    %24 = arith.truncf %23 : vector<128x128xf32> to vector<128x128xbf16>
    %cst_9 = arith.constant dense<0.000000e+00> : vector<32x128xf32>
    %25 = tpu.matmul %22, %24, %cst_9 {dimension_numbers = #tpu.dot_dimension_numbers<[1], [0], [0], [1], [0, 0, 1, 1], [], []>} : vector<32x128xbf16>, vector<128x128xbf16>, vector<32x128xf32> -> vector<32x128xf32>
    %26 = vector.shape_cast %25 : vector<32x128xf32> to vector<2x16x128xf32>
    %27 = arith.truncf %26 : vector<2x16x128xf32> to vector<2x16x128xbf16>
    "tpu.trace_start"() <{level = 10 : i32, message = "bmn,bnd->bmd"}> : () -> ()
    %cst_10 = arith.constant dense<0.000000e+00> : vector<2x16x128xf32>
    %28 = tpu.matmul %19, %27, %cst_10 {dimension_numbers = #tpu.dot_dimension_numbers<[2], [1], [1], [2], [0, 0, 0, 1, 1, 2], [0], [0]>} : vector<2x16x16xbf16>, vector<2x16x128xbf16>, vector<2x16x128xf32> -> vector<2x16x128xf32>
    "tpu.trace_stop"() : () -> ()
    %cst_11 = arith.constant 0.000000e+00 : f32
    %29 = vector.broadcast %cst_11 : f32 to vector<2x16x128xf32>
    %30 = arith.maximumf %28, %29 : vector<2x16x128xf32>
    %cst_12 = arith.constant dense<0.000000e+00> : vector<128xf32>
    %31 = vector.multi_reduction <add>, %30, %cst_12 [0, 1] : vector<2x16x128xf32> to vector<128xf32>
    %32 = vector.shape_cast %31 : vector<128xf32> to vector<1x1x128xf32>
    %33 = arith.mulf %30, %30 : vector<2x16x128xf32>
    %cst_13 = arith.constant dense<0.000000e+00> : vector<128xf32>
    %34 = vector.multi_reduction <add>, %33, %cst_13 [0, 1] : vector<2x16x128xf32> to vector<128xf32>
    %35 = vector.shape_cast %34 : vector<128xf32> to vector<1x1x128xf32>
    %cst_14 = arith.constant 3.125000e-02 : f32
    %36 = vector.broadcast %cst_14 : f32 to vector<1x1x128xf32>
    %37 = arith.mulf %32, %36 : vector<1x1x128xf32>
    %cst_15 = arith.constant 3.125000e-02 : f32
    %38 = vector.broadcast %cst_15 : f32 to vector<1x1x128xf32>
    %39 = arith.mulf %35, %38 : vector<1x1x128xf32>
    %40 = arith.mulf %37, %37 : vector<1x1x128xf32>
    %41 = arith.subf %39, %40 : vector<1x1x128xf32>
    %cst_16 = arith.constant 0.000000e+00 : f32
    %42 = vector.broadcast %cst_16 : f32 to vector<1x1x128xf32>
    %43 = arith.maximumf %41, %42 : vector<1x1x128xf32>
    %c0_17 = arith.constant 0 : index
    %c0_18 = arith.constant 0 : index
    %44 = vector.load %arg5[%c0_17, %c0_18] : memref<1x128xf32, #tpu.memory_space<vmem>>, vector<1x128xf32>
    %45 = vector.shape_cast %44 : vector<1x128xf32> to vector<1x1x128xf32>
    %c0_19 = arith.constant 0 : index
    %c0_20 = arith.constant 0 : index
    %46 = vector.load %arg6[%c0_19, %c0_20] : memref<1x128xf32, #tpu.memory_space<vmem>>, vector<1x128xf32>
    %47 = vector.shape_cast %46 : vector<1x128xf32> to vector<1x1x128xf32>
    %cst_21 = arith.constant 9.99999974E-6 : f32
    %48 = vector.broadcast %cst_21 : f32 to vector<1x1x128xf32>
    %49 = arith.addf %43, %48 : vector<1x1x128xf32>
    %50 = math.rsqrt %49 : vector<1x1x128xf32>
    %51 = arith.mulf %45, %50 : vector<1x1x128xf32>
    %52 = arith.mulf %37, %51 : vector<1x1x128xf32>
    %53 = arith.subf %47, %52 : vector<1x1x128xf32>
    %54 = vector.broadcast %51 : vector<1x1x128xf32> to vector<2x16x128xf32>
    %55 = arith.mulf %30, %54 : vector<2x16x128xf32>
    %56 = vector.broadcast %53 : vector<1x1x128xf32> to vector<2x16x128xf32>
    %57 = arith.addf %55, %56 : vector<2x16x128xf32>
    %58 = vector.shape_cast %57 : vector<2x16x128xf32> to vector<32x128xf32>
    %59 = arith.truncf %58 : vector<32x128xf32> to vector<32x128xbf16>
    %c0_22 = arith.constant 0 : index
    %c0_23 = arith.constant 0 : index
    %60 = vector.load %arg3[%c0_22, %c0_23] : memref<128x128xf32, #tpu.memory_space<vmem>>, vector<128x128xf32>
    %61 = arith.truncf %60 : vector<128x128xf32> to vector<128x128xbf16>
    %cst_24 = arith.constant dense<0.000000e+00> : vector<32x128xf32>
    %62 = tpu.matmul %59, %61, %cst_24 {dimension_numbers = #tpu.dot_dimension_numbers<[1], [0], [0], [1], [0, 0, 1, 1], [], []>} : vector<32x128xbf16>, vector<128x128xbf16>, vector<32x128xf32> -> vector<32x128xf32>
    %63 = vector.shape_cast %62 : vector<32x128xf32> to vector<2x16x128xf32>
    %64 = arith.truncf %63 : vector<2x16x128xf32> to vector<2x16x128xbf16>
    "tpu.trace_start"() <{level = 10 : i32, message = "bmn,bnd->bmd"}> : () -> ()
    %cst_25 = arith.constant dense<0.000000e+00> : vector<2x16x128xf32>
    %65 = tpu.matmul %19, %64, %cst_25 {dimension_numbers = #tpu.dot_dimension_numbers<[2], [1], [1], [2], [0, 0, 0, 1, 1, 2], [0], [0]>} : vector<2x16x16xbf16>, vector<2x16x128xbf16>, vector<2x16x128xf32> -> vector<2x16x128xf32>
    "tpu.trace_stop"() : () -> ()
    %cst_26 = arith.constant 0.000000e+00 : f32
    %66 = vector.broadcast %cst_26 : f32 to vector<2x16x128xf32>
    %67 = arith.maximumf %65, %66 : vector<2x16x128xf32>
    %cst_27 = arith.constant dense<0.000000e+00> : vector<128xf32>
    %68 = vector.multi_reduction <add>, %67, %cst_27 [0, 1] : vector<2x16x128xf32> to vector<128xf32>
    %69 = vector.shape_cast %68 : vector<128xf32> to vector<1x1x128xf32>
    %70 = arith.mulf %67, %67 : vector<2x16x128xf32>
    %cst_28 = arith.constant dense<0.000000e+00> : vector<128xf32>
    %71 = vector.multi_reduction <add>, %70, %cst_28 [0, 1] : vector<2x16x128xf32> to vector<128xf32>
    %72 = vector.shape_cast %71 : vector<128xf32> to vector<1x1x128xf32>
    %cst_29 = arith.constant 3.125000e-02 : f32
    %73 = vector.broadcast %cst_29 : f32 to vector<1x1x128xf32>
    %74 = arith.mulf %69, %73 : vector<1x1x128xf32>
    %cst_30 = arith.constant 3.125000e-02 : f32
    %75 = vector.broadcast %cst_30 : f32 to vector<1x1x128xf32>
    %76 = arith.mulf %72, %75 : vector<1x1x128xf32>
    %77 = arith.mulf %74, %74 : vector<1x1x128xf32>
    %78 = arith.subf %76, %77 : vector<1x1x128xf32>
    %cst_31 = arith.constant 0.000000e+00 : f32
    %79 = vector.broadcast %cst_31 : f32 to vector<1x1x128xf32>
    %80 = arith.maximumf %78, %79 : vector<1x1x128xf32>
    %c0_32 = arith.constant 0 : index
    %c0_33 = arith.constant 0 : index
    %81 = vector.load %arg7[%c0_32, %c0_33] : memref<1x128xf32, #tpu.memory_space<vmem>>, vector<1x128xf32>
    %82 = vector.shape_cast %81 : vector<1x128xf32> to vector<1x1x128xf32>
    %c0_34 = arith.constant 0 : index
    %c0_35 = arith.constant 0 : index
    %83 = vector.load %arg8[%c0_34, %c0_35] : memref<1x128xf32, #tpu.memory_space<vmem>>, vector<1x128xf32>
    %84 = vector.shape_cast %83 : vector<1x128xf32> to vector<1x1x128xf32>
    %cst_36 = arith.constant 9.99999974E-6 : f32
    %85 = vector.broadcast %cst_36 : f32 to vector<1x1x128xf32>
    %86 = arith.addf %80, %85 : vector<1x1x128xf32>
    %87 = math.rsqrt %86 : vector<1x1x128xf32>
    %88 = arith.mulf %82, %87 : vector<1x1x128xf32>
    %89 = arith.mulf %74, %88 : vector<1x1x128xf32>
    %90 = arith.subf %84, %89 : vector<1x1x128xf32>
    %91 = vector.broadcast %88 : vector<1x1x128xf32> to vector<2x16x128xf32>
    %92 = arith.mulf %67, %91 : vector<2x16x128xf32>
    %93 = vector.broadcast %90 : vector<1x1x128xf32> to vector<2x16x128xf32>
    %94 = arith.addf %92, %93 : vector<2x16x128xf32>
    %95 = vector.shape_cast %94 : vector<2x16x128xf32> to vector<32x128xf32>
    %96 = arith.truncf %95 : vector<32x128xf32> to vector<32x128xbf16>
    %c0_37 = arith.constant 0 : index
    %c0_38 = arith.constant 0 : index
    %97 = vector.load %arg4[%c0_37, %c0_38] : memref<128x128xf32, #tpu.memory_space<vmem>>, vector<128x128xf32>
    %98 = arith.truncf %97 : vector<128x128xf32> to vector<128x128xbf16>
    %cst_39 = arith.constant dense<0.000000e+00> : vector<32x128xf32>
    %99 = tpu.matmul %96, %98, %cst_39 {dimension_numbers = #tpu.dot_dimension_numbers<[1], [0], [0], [1], [0, 0, 1, 1], [], []>} : vector<32x128xbf16>, vector<128x128xbf16>, vector<32x128xf32> -> vector<32x128xf32>
    %100 = vector.shape_cast %99 : vector<32x128xf32> to vector<2x16x128xf32>
    %101 = arith.truncf %100 : vector<2x16x128xf32> to vector<2x16x128xbf16>
    "tpu.trace_start"() <{level = 10 : i32, message = "bmn,bnd->bmd"}> : () -> ()
    %cst_40 = arith.constant dense<0.000000e+00> : vector<2x16x128xf32>
    %102 = tpu.matmul %19, %101, %cst_40 {dimension_numbers = #tpu.dot_dimension_numbers<[2], [1], [1], [2], [0, 0, 0, 1, 1, 2], [0], [0]>} : vector<2x16x16xbf16>, vector<2x16x128xbf16>, vector<2x16x128xf32> -> vector<2x16x128xf32>
    "tpu.trace_stop"() : () -> ()
    %cst_41 = arith.constant 0.000000e+00 : f32
    %103 = vector.broadcast %cst_41 : f32 to vector<2x16x128xf32>
    %104 = arith.maximumf %102, %103 : vector<2x16x128xf32>
    %cst_42 = arith.constant dense<0.000000e+00> : vector<128xf32>
    %105 = vector.multi_reduction <add>, %104, %cst_42 [0, 1] : vector<2x16x128xf32> to vector<128xf32>
    %106 = vector.shape_cast %105 : vector<128xf32> to vector<1x1x128xf32>
    %107 = arith.mulf %104, %104 : vector<2x16x128xf32>
    %cst_43 = arith.constant dense<0.000000e+00> : vector<128xf32>
    %108 = vector.multi_reduction <add>, %107, %cst_43 [0, 1] : vector<2x16x128xf32> to vector<128xf32>
    %109 = vector.shape_cast %108 : vector<128xf32> to vector<1x1x128xf32>
    %cst_44 = arith.constant 3.125000e-02 : f32
    %110 = vector.broadcast %cst_44 : f32 to vector<1x1x128xf32>
    %111 = arith.mulf %106, %110 : vector<1x1x128xf32>
    %cst_45 = arith.constant 3.125000e-02 : f32
    %112 = vector.broadcast %cst_45 : f32 to vector<1x1x128xf32>
    %113 = arith.mulf %109, %112 : vector<1x1x128xf32>
    %114 = arith.mulf %111, %111 : vector<1x1x128xf32>
    %115 = arith.subf %113, %114 : vector<1x1x128xf32>
    %cst_46 = arith.constant 0.000000e+00 : f32
    %116 = vector.broadcast %cst_46 : f32 to vector<1x1x128xf32>
    %117 = arith.maximumf %115, %116 : vector<1x1x128xf32>
    %c0_47 = arith.constant 0 : index
    %c0_48 = arith.constant 0 : index
    %118 = vector.load %arg9[%c0_47, %c0_48] : memref<1x128xf32, #tpu.memory_space<vmem>>, vector<1x128xf32>
    %119 = vector.shape_cast %118 : vector<1x128xf32> to vector<1x1x128xf32>
    %c0_49 = arith.constant 0 : index
    %c0_50 = arith.constant 0 : index
    %120 = vector.load %arg10[%c0_49, %c0_50] : memref<1x128xf32, #tpu.memory_space<vmem>>, vector<1x128xf32>
    %121 = vector.shape_cast %120 : vector<1x128xf32> to vector<1x1x128xf32>
    %cst_51 = arith.constant 9.99999974E-6 : f32
    %122 = vector.broadcast %cst_51 : f32 to vector<1x1x128xf32>
    %123 = arith.addf %117, %122 : vector<1x1x128xf32>
    %124 = math.rsqrt %123 : vector<1x1x128xf32>
    %125 = arith.mulf %119, %124 : vector<1x1x128xf32>
    %126 = arith.mulf %111, %125 : vector<1x1x128xf32>
    %127 = arith.subf %121, %126 : vector<1x1x128xf32>
    %128 = vector.broadcast %125 : vector<1x1x128xf32> to vector<2x16x128xf32>
    %129 = arith.mulf %104, %128 : vector<2x16x128xf32>
    %130 = vector.broadcast %127 : vector<1x1x128xf32> to vector<2x16x128xf32>
    %131 = arith.addf %129, %130 : vector<2x16x128xf32>
    %c0_52 = arith.constant 0 : index
    %c0_53 = arith.constant 0 : index
    %c0_54 = arith.constant 0 : index
    %132 = vector.load %arg11[%c0_52, %c0_53, %c0_54] : memref<2x16x128xf32, #tpu.memory_space<vmem>>, vector<2x16x128xf32>
    tpu.vector_store %arg11[%c0_52, %c0_53, %c0_54], %131 {strides = array<i32>} : memref<2x16x128xf32, #tpu.memory_space<vmem>>, vector<2x16x128xf32>,
    return
  }
}

</mosaic_0001>

<llo_original>
// kernel: tpu_custom_call.1
$region0: #{tpu_custom_call.1}
  #allocation0 [shape = 'u32[]', space=smem, size = 0x4, offset = 0x4, fixed_abs, tag = 'smem constant byte address 0x4 - core index']
  #allocation1 [shape = 'u32[144,128]{1,0:T(1,128)}', space=vmem, size = 0x12000, scoped, tag = 'internal scratch']
  %s0 = inlined_call_operand.hbm [shape: f32[2,16,128], index: 0, kind: input, shape index: {}]
  %s1 = inlined_call_operand.hbm [shape: f32[2,16,16], index: 1, kind: input, shape index: {}]
  %s2 = inlined_call_operand.hbm [shape: f32[128,128], index: 2, kind: input, shape index: {}]
  %s3 = inlined_call_operand.hbm [shape: f32[128,128], index: 3, kind: input, shape index: {}]
  %s4 = inlined_call_operand.hbm [shape: f32[128,128], index: 4, kind: input, shape index: {}]
  %s5 = inlined_call_operand.vmem [shape: f32[1,128], index: 5, kind: input, shape index: {}]
  %s6 = inlined_call_operand.vmem [shape: f32[1,128], index: 6, kind: input, shape index: {}]
  %s7 = inlined_call_operand.vmem [shape: f32[1,128], index: 7, kind: input, shape index: {}]
  %s8 = inlined_call_operand.vmem [shape: f32[1,128], index: 8, kind: input, shape index: {}]
  %s9 = inlined_call_operand.vmem [shape: f32[1,128], index: 9, kind: input, shape index: {}]
  %s10 = inlined_call_operand.vmem [shape: f32[1,128], index: 10, kind: input, shape index: {}]
  %s11 = inlined_call_operand.hbm [shape: f32[2,16,128], index: 11, kind: output, shape index: {}]
  %s12 = sld [smem:[#allocation0]]
  $region74: #{tpu_custom_call.1} parent=0
    _
  %s14 = ssub.s32 1, %s12
  %s15 = scalar_select 0, %s14, %s12
  $region1: #{tpu_custom_call.1} parent=0
    #allocation2 [shape = 'u8[16384]{0}', space=vmem, size = 0x4000, scoped, tag = 'input window, operand 0, single buffered']
    #allocation3 [shape = 's32[1]{0}', space=sflag, size = 0x4, scoped, tag = 'scoped memory for tpu_custom_call.1']
    #allocation4 [shape = 's32[1]{0}', space=sflag, size = 0x4, scoped, tag = 'scoped memory for tpu_custom_call.1']
    #allocation5 [shape = 'u8[16384]{0}', space=vmem, size = 0x4000, scoped, tag = 'input window, operand 1, single buffered']
    #allocation6 [shape = 's32[1]{0}', space=sflag, size = 0x4, scoped, tag = 'scoped memory for tpu_custom_call.1']
    #allocation7 [shape = 'u8[65536]{0}', space=vmem, size = 0x10000, scoped, tag = 'input window, operand 2, single buffered']
    #allocation8 [shape = 'u8[65536]{0}', space=vmem, size = 0x10000, scoped, tag = 'input window, operand 3, single buffered']
    #allocation9 [shape = 's32[1]{0}', space=sflag, size = 0x4, scoped, tag = 'scoped memory for tpu_custom_call.1']
    #allocation10 [shape = 'u8[65536]{0}', space=vmem, size = 0x10000, scoped, tag = 'input window, operand 4, single buffered']
    #allocation11 [shape = 'u8[16384]{0}', space=vmem, size = 0x4000, scoped, tag = 'output window, operand 0, single buffered']
    %16 = vsyncpa [#allocation3], 0
    %17 = vsyncpa [#allocation6], 0
    %18 = vsyncpa [#allocation9], 0
    %19 = vsyncpa [#allocation4], 0
    // Predicated region
    $region2: #{tpu_custom_call.1} parent=1 // pred_check
      _
    $region3: #{tpu_custom_call.1} parent=1 // pred_check_branch
      %21 = sbr.rel (0) target = $region5
    $region4: #{tpu_custom_call.1} parent=1 // pred_region
      %s23 = ssub.s32 512, 512
      %24 = vsyncadd [#allocation3], %s23
      %s25 = sshll.u32 [#allocation2], 4
      %s26 = int_to_ptr.vmem [resolvable:$true] %s25
      %31 = dma.hbm_to_vmem [thread:$0]  %s0, 512, %s26, [#allocation3], 128, 128, 8
    $region5: #{tpu_custom_call.1} parent=1 // pred_fallthru
      _
    // Predicated region
    $region6: #{tpu_custom_call.1} parent=1 // pred_check
      _
    $region7: #{tpu_custom_call.1} parent=1 // pred_check_branch
      %33 = sbr.rel (0) target = $region9
    $region8: #{tpu_custom_call.1} parent=1 // pred_region
      %s35 = ssub.s32 512, 512
      %36 = vsyncadd [#allocation6], %s35
      %s37 = sshll.u32 [#allocation5], 4
      %s38 = int_to_ptr.vmem [resolvable:$true] %s37
      %43 = dma.hbm_to_vmem [thread:$0]  %s1, 512, %s38, [#allocation6], 128, 128, 8
    $region9: #{tpu_custom_call.1} parent=1 // pred_fallthru
      _
    // Predicated region
    $region10: #{tpu_custom_call.1} parent=1 // pred_check
      _
    $region11: #{tpu_custom_call.1} parent=1 // pred_check_branch
      %45 = sbr.rel (0) target = $region13
    $region12: #{tpu_custom_call.1} parent=1 // pred_region
      %s47 = ssub.s32 2048, 2048
      %48 = vsyncadd [#allocation6], %s47
      %s49 = sshll.u32 [#allocation7], 4
      %s50 = int_to_ptr.vmem [resolvable:$true] %s49
      %55 = dma.hbm_to_vmem [thread:$0]  %s2, 2048, %s50, [#allocation6], 128, 128, 8
    $region13: #{tpu_custom_call.1} parent=1 // pred_fallthru
      _
    // Predicated region
    $region14: #{tpu_custom_call.1} parent=1 // pred_check
      _
    $region15: #{tpu_custom_call.1} parent=1 // pred_check_branch
      %57 = sbr.rel (0) target = $region17
    $region16: #{tpu_custom_call.1} parent=1 // pred_region
      %s59 = ssub.s32 2048, 2048
      %60 = vsyncadd [#allocation9], %s59
      %s61 = sshll.u32 [#allocation8], 4
      %s62 = int_to_ptr.vmem [resolvable:$true] %s61
      %67 = dma.hbm_to_vmem [thread:$0]  %s3, 2048, %s62, [#allocation9], 128, 128, 8
    $region17: #{tpu_custom_call.1} parent=1 // pred_fallthru
      _
    // Predicated region
    $region18: #{tpu_custom_call.1} parent=1 // pred_check
      _
    $region19: #{tpu_custom_call.1} parent=1 // pred_check_branch
      %69 = sbr.rel (0) target = $region21
    $region20: #{tpu_custom_call.1} parent=1 // pred_region
      %s71 = ssub.s32 2048, 2048
      %72 = vsyncadd [#allocation9], %s71
      %s73 = sshll.u32 [#allocation10], 4
      %s74 = int_to_ptr.vmem [resolvable:$true] %s73
      %79 = dma.hbm_to_vmem [thread:$0]  %s4, 2048, %s74, [#allocation9], 128, 128, 8
    $region21: #{tpu_custom_call.1} parent=1 // pred_fallthru
      _
    // Predicated region
    $region22: #{tpu_custom_call.1} parent=1 // pred_check
      _
    $region23: #{tpu_custom_call.1} parent=1 // pred_check_branch
      %81 = sbr.rel (0) target = $region25
    $region24: #{tpu_custom_call.1} parent=1 // pred_region
      _
    $region25: #{tpu_custom_call.1} parent=1 // pred_fallthru
      _
    // Predicated region
    $region26: #{tpu_custom_call.1} parent=1 // pred_check
      _
    $region27: #{tpu_custom_call.1} parent=1 // pred_check_branch
      %83 = sbr.rel (0) target = $region29
    $region28: #{tpu_custom_call.1} parent=1 // pred_region
      _
    $region29: #{tpu_custom_call.1} parent=1 // pred_fallthru
      _
    // Predicated region
    $region30: #{tpu_custom_call.1} parent=1 // pred_check
      _
    $region31: #{tpu_custom_call.1} parent=1 // pred_check_branch
      %85 = sbr.rel (0) target = $region33
    $region32: #{tpu_custom_call.1} parent=1 // pred_region
      _
    $region33: #{tpu_custom_call.1} parent=1 // pred_fallthru
      _
    // Predicated region
    $region34: #{tpu_custom_call.1} parent=1 // pred_check
      _
    $region35: #{tpu_custom_call.1} parent=1 // pred_check_branch
      %87 = sbr.rel (0) target = $region37
    $region36: #{tpu_custom_call.1} parent=1 // pred_region
      _
    $region37: #{tpu_custom_call.1} parent=1 // pred_fallthru
      _
    // Predicated region
    $region38: #{tpu_custom_call.1} parent=1 // pred_check
      _
    $region39: #{tpu_custom_call.1} parent=1 // pred_check_branch
      %89 = sbr.rel (0) target = $region41
    $region40: #{tpu_custom_call.1} parent=1 // pred_region
      _
    $region41: #{tpu_custom_call.1} parent=1 // pred_fallthru
      _
    // Predicated region
    $region42: #{tpu_custom_call.1} parent=1 // pred_check
      _
    $region43: #{tpu_custom_call.1} parent=1 // pred_check_branch
      %91 = sbr.rel (0) target = $region45
    $region44: #{tpu_custom_call.1} parent=1 // pred_region
      _
    $region45: #{tpu_custom_call.1} parent=1 // pred_fallthru
      _
    // Predicated region
    $region46: #{tpu_custom_call.1} parent=1 // pred_check
      _
    $region47: #{tpu_custom_call.1} parent=1 // pred_check_branch
      %93 = sbr.rel (0) target = $region49
    $region48: #{tpu_custom_call.1} parent=1 // pred_region
      %94 = dma.done [#allocation3], 512
    $region49: #{tpu_custom_call.1} parent=1 // pred_fallthru
      _
    // Predicated region
    $region50: #{tpu_custom_call.1} parent=1 // pred_check
      _
    $region51: #{tpu_custom_call.1} parent=1 // pred_check_branch
      %96 = sbr.rel (0) target = $region53
    $region52: #{tpu_custom_call.1} parent=1 // pred_region
      %97 = dma.done [#allocation6], 512
    $region53: #{tpu_custom_call.1} parent=1 // pred_fallthru
      _
    // Predicated region
    $region54: #{tpu_custom_call.1} parent=1 // pred_check
      _
    $region55: #{tpu_custom_call.1} parent=1 // pred_check_branch
      %99 = sbr.rel (0) target = $region57
    $region56: #{tpu_custom_call.1} parent=1 // pred_region
      %100 = dma.done [#allocation6], 2048
    $region57: #{tpu_custom_call.1} parent=1 // pred_fallthru
      _
    // Predicated region
    $region58: #{tpu_custom_call.1} parent=1 // pred_check
      _
    $region59: #{tpu_custom_call.1} parent=1 // pred_check_branch
      %102 = sbr.rel (0) target = $region61
    $region60: #{tpu_custom_call.1} parent=1 // pred_region
      %103 = dma.done [#allocation9], 2048
    $region61: #{tpu_custom_call.1} parent=1 // pred_fallthru
      _
    // Predicated region
    $region62: #{tpu_custom_call.1} parent=1 // pred_check
      _
    $region63: #{tpu_custom_call.1} parent=1 // pred_check_branch
      %105 = sbr.rel (0) target = $region65
    $region64: #{tpu_custom_call.1} parent=1 // pred_region
      %106 = dma.done [#allocation9], 2048
    $region65: #{tpu_custom_call.1} parent=1 // pred_fallthru
      _
    %v108 = vld [vmem:[#allocation5] sm:$0xff]
    %v109 = vld [vmem:[#allocation5 + $0x8] sm:$0xff]
    %v110 = vld [vmem:[#allocation5 + $0x10] sm:$0xff]
    %v111 = vld [vmem:[#allocation5 + $0x18] sm:$0xff]
    %v112 = vlaneseq
    %v113 = vshrl.u32 %v112, 7
    %v114 = vadd.s32 %v113, 8
    %v115 = vlaneseq
    %v116 = vand.u32 %v115, 127
    %vm117 = vcmp.eq.s32.totalorder %v113, %v116
    %vm118 = vcmp.eq.s32.totalorder %v114, %v116
    %v119 = vsel %vm117, 1, 0
    %v120 = vsel %vm118, 1, 0
    %vm121 = vcmp.eq.s32.totalorder %v119, 1
    %vm122 = vcmp.eq.s32.totalorder %v120, 1
    %v123 = vsel %vm121, 1.0, %v108
    %v124 = vsel %vm122, 1.0, %v109
    %v125 = vsel %vm121, 1.0, %v110
    %v126 = vsel %vm122, 1.0, %v111
    %vm127 = vcmask 130048
    %v128 = vsel %vm127, %v123, 0.0
    %129 = vadd.xlane.f32.xlu0 %v128
    %v130 = vpop.xlane.xlu0 %129
    %v131 = vsel %vm127, %v124, 0.0
    %132 = vadd.xlane.f32.xlu0 %v131
    %v133 = vpop.xlane.xlu0 %132
    %v134 = vsel %vm127, %v125, 0.0
    %135 = vadd.xlane.f32.xlu0 %v134
    %v136 = vpop.xlane.xlu0 %135
    %v137 = vsel %vm127, %v126, 0.0
    %138 = vadd.xlane.f32.xlu0 %v137
    %v139 = vpop.xlane.xlu0 %138
    %v140 = vmax.f32 %v130, 1.0
    %v141 = vmax.f32 %v133, 1.0
    %v142 = vmax.f32 %v136, 1.0
    %v143 = vmax.f32 %v139, 1.0
    %v144 = vrsqrt.pop %v140
    %v145 = vrsqrt.pop %v141
    %v146 = vrsqrt.pop %v142
    %v147 = vrsqrt.pop %v143
    %v148 = vmul.f32 %v123, %v144
    %v149 = vmul.f32 %v124, %v145
    %v150 = vmul.f32 %v125, %v146
    %v151 = vmul.f32 %v126, %v147
    %v156 = vlaneseq
    %v157 = vshrl.u32 %v156, 7
    %v158 = vsub.s32 %v116, %v157
    %v159 = vrot.slane %v144, %v158
    %v160 = vadd.s32 %v116, 4294967288
    %v161 = vlaneseq
    %v162 = vshrl.u32 %v161, 7
    %v163 = vsub.s32 %v160, %v162
    %v164 = vrot.slane %v145, %v163
    %vm165 = vcmask 130112
    %v166 = vsel %vm165, %v164, %v159
    %v167 = vlaneseq
    %v168 = vshrl.u32 %v167, 7
    %v169 = vsub.s32 %v116, %v168
    %v170 = vrot.slane %v146, %v169
    %v171 = vlaneseq
    %v172 = vshrl.u32 %v171, 7
    %v173 = vsub.s32 %v160, %v172
    %v174 = vrot.slane %v147, %v173
    %v175 = vsel %vm165, %v174, %v170
    %vm176 = vcmask 1042434
    %v177 = vsel %vm176, %v166, %v166
    %vm178 = vcmask 1043459
    %v179 = vsel %vm178, %v166, %v177
    %vm180 = vcmask 1044484
    %v181 = vsel %vm180, %v166, %v179
    %vm182 = vcmask 1045509
    %v183 = vsel %vm182, %v166, %v181
    %vm184 = vcmask 1046534
    %v185 = vsel %vm184, %v166, %v183
    %vm186 = vcmask 1047559
    %v187 = vsel %vm186, %v166, %v185
    %v188 = vsel %vm176, %v175, %v175
    %v189 = vsel %vm178, %v175, %v188
    %v190 = vsel %vm180, %v175, %v189
    %v191 = vsel %vm182, %v175, %v190
    %v192 = vsel %vm184, %v175, %v191
    %v193 = vsel %vm186, %v175, %v192
    %v196 = vmul.f32 %v148, %v187
    %v197 = vmul.f32 %v149, %v187
    %v198 = vmul.f32 %v150, %v193
    %v199 = vmul.f32 %v151, %v193
    %v200 = vpack.c.bf16 %v197, %v196
    %v201 = vpack.c.bf16 %v199, %v198
    %v202 = vld [vmem:[#allocation2] sm:$0xff]
    %v203 = vld [vmem:[#allocation2 + $0x8] sm:$0xff]
    %v204 = vld [vmem:[#allocation2 + $0x10] sm:$0xff]
    %v205 = vld [vmem:[#allocation2 + $0x18] sm:$0xff]
    %v206 = vpack.c.bf16 %v203, %v202
    %v207 = vpack.c.bf16 %v205, %v204
    %v208 = vld [vmem:[#allocation7] sm:$0xff]
    %v209 = vld [vmem:[#allocation7 + $0x8] sm:$0xff]
    %v210 = vld [vmem:[#allocation7 + $0x10] sm:$0xff]
    %v211 = vld [vmem:[#allocation7 + $0x18] sm:$0xff]
    %v212 = vld [vmem:[#allocation7 + $0x20] sm:$0xff]
    %v213 = vld [vmem:[#allocation7 + $0x28] sm:$0xff]
    %v214 = vld [vmem:[#allocation7 + $0x30] sm:$0xff]
    %v215 = vld [vmem:[#allocation7 + $0x38] sm:$0xff]
    %v216 = vld [vmem:[#allocation7 + $0x40] sm:$0xff]
    %v217 = vld [vmem:[#allocation7 + $0x48] sm:$0xff]
    %v218 = vld [vmem:[#allocation7 + $0x50] sm:$0xff]
    %v219 = vld [vmem:[#allocation7 + $0x58] sm:$0xff]
    %v220 = vld [vmem:[#allocation7 + $0x60] sm:$0xff]
    %v221 = vld [vmem:[#allocation7 + $0x68] sm:$0xff]
    %v222 = vld [vmem:[#allocation7 + $0x70] sm:$0xff]
    %v223 = vld [vmem:[#allocation7 + $0x78] sm:$0xff]
    %v224 = vpack.c.bf16 %v209, %v208
    %v225 = vpack.c.bf16 %v211, %v210
    %v226 = vpack.c.bf16 %v213, %v212
    %v227 = vpack.c.bf16 %v215, %v214
    %v228 = vpack.c.bf16 %v217, %v216
    %v229 = vpack.c.bf16 %v219, %v218
    %v230 = vpack.c.bf16 %v221, %v220
    %v231 = vpack.c.bf16 %v223, %v222
    %232 = vmatprep.subr.bf16.mxu0 0
    %233 = vmatpush1.bf16.msra.mxu0 %v231
    %234 = vmatprep.subr.bf16.mxu0 0
    %235 = vmatpush1.bf16.msra.mxu0 %v230
    %236 = vmatprep.subr.bf16.mxu0 0
    %237 = vmatpush1.bf16.msra.mxu0 %v229
    %238 = vmatprep.subr.bf16.mxu0 0
    %239 = vmatpush1.bf16.msra.mxu0 %v228
    %240 = vmatprep.subr.bf16.mxu0 0
    %241 = vmatpush1.bf16.msra.mxu0 %v227
    %242 = vmatprep.subr.bf16.mxu0 0
    %243 = vmatpush1.bf16.msra.mxu0 %v226
    %244 = vmatprep.subr.bf16.mxu0 0
    %245 = vmatpush1.bf16.msra.mxu0 %v225
    %246 = vmatprep.subr.bf16.mxu0 0
    %247 = vmatpush1.bf16.msra.mxu0 %v224
    %248 = vmatprep.subr.bf16.mxu0 0
    %249 = vmatpush2.bf16.msra.mxu0 0
    %250 = vmatprep.subr.bf16.mxu0 0
    %251 = vmatpush2.bf16.msra.mxu0 0
    %252 = vmatprep.subr.bf16.mxu0 0
    %253 = vmatpush2.bf16.msra.mxu0 0
    %254 = vmatprep.subr.bf16.mxu0 0
    %255 = vmatpush2.bf16.msra.mxu0 0
    %256 = vmatprep.subr.bf16.mxu0 0
    %257 = vmatpush2.bf16.msra.mxu0 0
    %258 = vmatprep.subr.bf16.mxu0 0
    %259 = vmatpush2.bf16.msra.mxu0 0
    %260 = vmatprep.subr.bf16.mxu0 0
    %261 = vmatpush2.bf16.msra.mxu0 0
    %262 = vmatprep.subr.bf16.mxu0 0
    %263 = vmatpush2.bf16.msra.mxu0 0
    %264 = vmatprep.mubr.bf16.mxu0 0
    %265 = vmatmul.mubr.bf16.gmra.mxu0 %v206
    %v266 = vpop.f32.mrf.mxu0
    %v267 = vadd.f32 0.0, %v266
    %v268 = vpop.f32.mrf.mxu0
    %v269 = vpop.f32.mrf.mxu0
    %v270 = vadd.f32 0.0, %v269
    %v271 = vpop.f32.mrf.mxu0
    %272 = vmatprep.mubr.bf16.mxu0 0
    %273 = vmatmul.mubr.bf16.gmra.mxu0 %v207
    %v274 = vpop.f32.mrf.mxu0
    %v275 = vadd.f32 0.0, %v274
    %v276 = vpop.f32.mrf.mxu0
    %v277 = vpop.f32.mrf.mxu0
    %v278 = vadd.f32 0.0, %v277
    %v279 = vpop.f32.mrf.mxu0
    %280 = vdwg.mxu0
    %v281 = vpack.c.bf16 %v270, %v267
    %v282 = vpack.c.bf16 %v278, %v275
    %v284 = vsel %vm127, %v200, 0
    %286 = vmatprep.subr.bf16.mxu0 0
    %287 = vmatpush1.bf16.msra.mxu0 0
    %288 = vmatprep.subr.bf16.mxu0 0
    %289 = vmatpush1.bf16.msra.mxu0 0
    %290 = vmatprep.subr.bf16.mxu0 0
    %291 = vmatpush1.bf16.msra.mxu0 0
    %292 = vmatprep.subr.bf16.mxu0 0
    %293 = vmatpush1.bf16.msra.mxu0 0
    %294 = vmatprep.subr.bf16.mxu0 0
    %295 = vmatpush1.bf16.msra.mxu0 0
    %296 = vmatprep.subr.bf16.mxu0 0
    %297 = vmatpush1.bf16.msra.mxu0 0
    %298 = vmatprep.subr.bf16.mxu0 0
    %299 = vmatpush1.bf16.msra.mxu0 0
    %300 = vmatprep.subr.bf16.mxu0 0
    %301 = vmatpush1.bf16.msra.mxu0 %v281
    %302 = vmatprep.subr.bf16.mxu0 0
    %303 = vmatpush2.bf16.msra.mxu0 0
    %304 = vmatprep.subr.bf16.mxu0 0
    %305 = vmatpush2.bf16.msra.mxu0 0
    %306 = vmatprep.subr.bf16.mxu0 0
    %307 = vmatpush2.bf16.msra.mxu0 0
    %308 = vmatprep.subr.bf16.mxu0 0
    %309 = vmatpush2.bf16.msra.mxu0 0
    %310 = vmatprep.subr.bf16.mxu0 0
    %311 = vmatpush2.bf16.msra.mxu0 0
    %312 = vmatprep.subr.bf16.mxu0 0
    %313 = vmatpush2.bf16.msra.mxu0 0
    %314 = vmatprep.subr.bf16.mxu0 0
    %315 = vmatpush2.bf16.msra.mxu0 0
    %316 = vmatprep.subr.bf16.mxu0 0
    %317 = vmatpush2.bf16.msra.mxu0 0
    %318 = vmatprep.mubr.bf16.mxu0 0
    %319 = vmatmul.mubr.bf16.gmra.mxu0 %v284
    %v320 = vpop.f32.mrf.mxu0
    %v321 = vadd.f32 0.0, %v320
    %v322 = vpop.f32.mrf.mxu0
    %v323 = vpop.f32.mrf.mxu0
    %v324 = vadd.f32 0.0, %v323
    %v325 = vpop.f32.mrf.mxu0
    %326 = vdwg.mxu0
    %v328 = vsel %vm127, %v201, 0
    %330 = vmatprep.subr.bf16.mxu0 0
    %331 = vmatpush1.bf16.msra.mxu0 0
    %332 = vmatprep.subr.bf16.mxu0 0
    %333 = vmatpush1.bf16.msra.mxu0 0
    %334 = vmatprep.subr.bf16.mxu0 0
    %335 = vmatpush1.bf16.msra.mxu0 0
    %336 = vmatprep.subr.bf16.mxu0 0
    %337 = vmatpush1.bf16.msra.mxu0 0
    %338 = vmatprep.subr.bf16.mxu0 0
    %339 = vmatpush1.bf16.msra.mxu0 0
    %340 = vmatprep.subr.bf16.mxu0 0
    %341 = vmatpush1.bf16.msra.mxu0 0
    %342 = vmatprep.subr.bf16.mxu0 0
    %343 = vmatpush1.bf16.msra.mxu0 0
    %344 = vmatprep.subr.bf16.mxu0 0
    %345 = vmatpush1.bf16.msra.mxu0 %v282
    %346 = vmatprep.subr.bf16.mxu0 0
    %347 = vmatpush2.bf16.msra.mxu0 0
    %348 = vmatprep.subr.bf16.mxu0 0
    %349 = vmatpush2.bf16.msra.mxu0 0
    %350 = vmatprep.subr.bf16.mxu0 0
    %351 = vmatpush2.bf16.msra.mxu0 0
    %352 = vmatprep.subr.bf16.mxu0 0
    %353 = vmatpush2.bf16.msra.mxu0 0
    %354 = vmatprep.subr.bf16.mxu0 0
    %355 = vmatpush2.bf16.msra.mxu0 0
    %356 = vmatprep.subr.bf16.mxu0 0
    %357 = vmatpush2.bf16.msra.mxu0 0
    %358 = vmatprep.subr.bf16.mxu0 0
    %359 = vmatpush2.bf16.msra.mxu0 0
    %360 = vmatprep.subr.bf16.mxu0 0
    %361 = vmatpush2.bf16.msra.mxu0 0
    %362 = vmatprep.mubr.bf16.mxu0 0
    %363 = vmatmul.mubr.bf16.gmra.mxu0 %v328
    %v364 = vpop.f32.mrf.mxu0
    %v365 = vadd.f32 0.0, %v364
    %v366 = vpop.f32.mrf.mxu0
    %v367 = vpop.f32.mrf.mxu0
    %v368 = vadd.f32 0.0, %v367
    %v369 = vpop.f32.mrf.mxu0
    %370 = vdwg.mxu0
    %v371 = vmax.f32 %v321, 0.0
    %v372 = vmax.f32 %v324, 0.0
    %v373 = vmax.f32 %v365, 0.0
    %v374 = vmax.f32 %v368, 0.0
    %v375 = vadd.f32 %v371, %v372
    %v376 = vadd.f32 %v375, %v373
    %v377 = vadd.f32 %v376, %v374
    %v378 = vrot.slane %v377, 4
    %v379 = vadd.f32 %v377, %v378
    %v380 = vrot.slane %v379, 2
    %v381 = vadd.f32 %v379, %v380
    %v382 = vrot.slane %v381, 1
    %v383 = vadd.f32 %v381, %v382
    %v384 = vmul.f32 %v371, %v371
    %v385 = vmul.f32 %v372, %v372
    %v386 = vmul.f32 %v373, %v373
    %v387 = vmul.f32 %v374, %v374
    %v388 = vadd.f32 %v384, %v385
    %v389 = vadd.f32 %v388, %v386
    %v390 = vadd.f32 %v389, %v387
    %v391 = vrot.slane %v390, 4
    %v392 = vadd.f32 %v390, %v391
    %v393 = vrot.slane %v392, 2
    %v394 = vadd.f32 %v392, %v393
    %v395 = vrot.slane %v394, 1
    %v396 = vadd.f32 %v394, %v395
    %v397 = vmul.f32 %v383, 0.03125
    %v398 = vmul.f32 %v396, 0.03125
    %v399 = vmul.f32 %v397, %v397
    %v400 = vsub.f32 %v398, %v399
    %v401 = vmax.f32 %v400, 0.0
    %v402 = vld [vmem:[%s5] sm:$0x1]
    %v403 = vld [vmem:[%s6] sm:$0x1]
    %v404 = vadd.f32 %v401, 1e-05
    %v405 = vrsqrt.pop %v404
    %v406 = vmul.f32 %v402, %v405
    %v407 = vmul.f32 %v397, %v406
    %v408 = vsub.f32 %v403, %v407
    %v410 = vlaneseq
    %v411 = vshrl.u32 %v410, 7
    %v412 = vsub.s32 0, %v411
    %v413 = vrot.slane %v406, %v412
    %v415 = vmul.f32 %v371, %v413
    %v416 = vmul.f32 %v372, %v413
    %v417 = vmul.f32 %v373, %v413
    %v418 = vmul.f32 %v374, %v413
    %v420 = vlaneseq
    %v421 = vshrl.u32 %v420, 7
    %v422 = vsub.s32 0, %v421
    %v423 = vrot.slane %v408, %v422
    %v425 = vadd.f32 %v415, %v423
    %v426 = vadd.f32 %v416, %v423
    %v427 = vadd.f32 %v417, %v423
    %v428 = vadd.f32 %v418, %v423
    %v429 = vpack.c.bf16 %v426, %v425
    %v430 = vpack.c.bf16 %v428, %v427
    %v431 = vld [vmem:[#allocation8] sm:$0xff]
    %v432 = vld [vmem:[#allocation8 + $0x8] sm:$0xff]
    %v433 = vld [vmem:[#allocation8 + $0x10] sm:$0xff]
    %v434 = vld [vmem:[#allocation8 + $0x18] sm:$0xff]
    %v435 = vld [vmem:[#allocation8 + $0x20] sm:$0xff]
    %v436 = vld [vmem:[#allocation8 + $0x28] sm:$0xff]
    %v437 = vld [vmem:[#allocation8 + $0x30] sm:$0xff]
    %v438 = vld [vmem:[#allocation8 + $0x38] sm:$0xff]
    %v439 = vld [vmem:[#allocation8 + $0x40] sm:$0xff]
    %v440 = vld [vmem:[#allocation8 + $0x48] sm:$0xff]
    %v441 = vld [vmem:[#allocation8 + $0x50] sm:$0xff]
    %v442 = vld [vmem:[#allocation8 + $0x58] sm:$0xff]
    %v443 = vld [vmem:[#allocation8 + $0x60] sm:$0xff]
    %v444 = vld [vmem:[#allocation8 + $0x68] sm:$0xff]
    %v445 = vld [vmem:[#allocation8 + $0x70] sm:$0xff]
    %v446 = vld [vmem:[#allocation8 + $0x78] sm:$0xff]
    %v447 = vpack.c.bf16 %v432, %v431
    %v448 = vpack.c.bf16 %v434, %v433
    %v449 = vpack.c.bf16 %v436, %v435
    %v450 = vpack.c.bf16 %v438, %v437
    %v451 = vpack.c.bf16 %v440, %v439
    %v452 = vpack.c.bf16 %v442, %v441
    %v453 = vpack.c.bf16 %v444, %v443
    %v454 = vpack.c.bf16 %v446, %v445
    %455 = vmatprep.subr.bf16.mxu0 0
    %456 = vmatpush1.bf16.msra.mxu0 %v454
    %457 = vmatprep.subr.bf16.mxu0 0
    %458 = vmatpush1.bf16.msra.mxu0 %v453
    %459 = vmatprep.subr.bf16.mxu0 0
    %460 = vmatpush1.bf16.msra.mxu0 %v452
    %461 = vmatprep.subr.bf16.mxu0 0
    %462 = vmatpush1.bf16.msra.mxu0 %v451
    %463 = vmatprep.subr.bf16.mxu0 0
    %464 = vmatpush1.bf16.msra.mxu0 %v450
    %465 = vmatprep.subr.bf16.mxu0 0
    %466 = vmatpush1.bf16.msra.mxu0 %v449
    %467 = vmatprep.subr.bf16.mxu0 0
    %468 = vmatpush1.bf16.msra.mxu0 %v448
    %469 = vmatprep.subr.bf16.mxu0 0
    %470 = vmatpush1.bf16.msra.mxu0 %v447
    %471 = vmatprep.subr.bf16.mxu0 0
    %472 = vmatpush2.bf16.msra.mxu0 0
    %473 = vmatprep.subr.bf16.mxu0 0
    %474 = vmatpush2.bf16.msra.mxu0 0
    %475 = vmatprep.subr.bf16.mxu0 0
    %476 = vmatpush2.bf16.msra.mxu0 0
    %477 = vmatprep.subr.bf16.mxu0 0
    %478 = vmatpush2.bf16.msra.mxu0 0
    %479 = vmatprep.subr.bf16.mxu0 0
    %480 = vmatpush2.bf16.msra.mxu0 0
    %481 = vmatprep.subr.bf16.mxu0 0
    %482 = vmatpush2.bf16.msra.mxu0 0
    %483 = vmatprep.subr.bf16.mxu0 0
    %484 = vmatpush2.bf16.msra.mxu0 0
    %485 = vmatprep.subr.bf16.mxu0 0
    %486 = vmatpush2.bf16.msra.mxu0 0
    %487 = vmatprep.mubr.bf16.mxu0 0
    %488 = vmatmul.mubr.bf16.gmra.mxu0 %v429
    %v489 = vpop.f32.mrf.mxu0
    %v490 = vadd.f32 0.0, %v489
    %v491 = vpop.f32.mrf.mxu0
    %v492 = vpop.f32.mrf.mxu0
    %v493 = vadd.f32 0.0, %v492
    %v494 = vpop.f32.mrf.mxu0
    %495 = vmatprep.mubr.bf16.mxu0 0
    %496 = vmatmul.mubr.bf16.gmra.mxu0 %v430
    %v497 = vpop.f32.mrf.mxu0
    %v498 = vadd.f32 0.0, %v497
    %v499 = vpop.f32.mrf.mxu0
    %v500 = vpop.f32.mrf.mxu0
    %v501 = vadd.f32 0.0, %v500
    %v502 = vpop.f32.mrf.mxu0
    %503 = vdwg.mxu0
    %v504 = vpack.c.bf16 %v493, %v490
    %v505 = vpack.c.bf16 %v501, %v498
    %506 = vmatprep.subr.bf16.mxu0 0
    %507 = vmatpush1.bf16.msra.mxu0 0
    %508 = vmatprep.subr.bf16.mxu0 0
    %509 = vmatpush1.bf16.msra.mxu0 0
    %510 = vmatprep.subr.bf16.mxu0 0
    %511 = vmatpush1.bf16.msra.mxu0 0
    %512 = vmatprep.subr.bf16.mxu0 0
    %513 = vmatpush1.bf16.msra.mxu0 0
    %514 = vmatprep.subr.bf16.mxu0 0
    %515 = vmatpush1.bf16.msra.mxu0 0
    %516 = vmatprep.subr.bf16.mxu0 0
    %517 = vmatpush1.bf16.msra.mxu0 0
    %518 = vmatprep.subr.bf16.mxu0 0
    %519 = vmatpush1.bf16.msra.mxu0 0
    %520 = vmatprep.subr.bf16.mxu0 0
    %521 = vmatpush1.bf16.msra.mxu0 %v504
    %522 = vmatprep.subr.bf16.mxu0 0
    %523 = vmatpush2.bf16.msra.mxu0 0
    %524 = vmatprep.subr.bf16.mxu0 0
    %525 = vmatpush2.bf16.msra.mxu0 0
    %526 = vmatprep.subr.bf16.mxu0 0
    %527 = vmatpush2.bf16.msra.mxu0 0
    %528 = vmatprep.subr.bf16.mxu0 0
    %529 = vmatpush2.bf16.msra.mxu0 0
    %530 = vmatprep.subr.bf16.mxu0 0
    %531 = vmatpush2.bf16.msra.mxu0 0
    %532 = vmatprep.subr.bf16.mxu0 0
    %533 = vmatpush2.bf16.msra.mxu0 0
    %534 = vmatprep.subr.bf16.mxu0 0
    %535 = vmatpush2.bf16.msra.mxu0 0
    %536 = vmatprep.subr.bf16.mxu0 0
    %537 = vmatpush2.bf16.msra.mxu0 0
    %538 = vmatprep.mubr.bf16.mxu0 0
    %539 = vmatmul.mubr.bf16.gmra.mxu0 %v284
    %v540 = vpop.f32.mrf.mxu0
    %v541 = vadd.f32 0.0, %v540
    %v542 = vpop.f32.mrf.mxu0
    %v543 = vpop.f32.mrf.mxu0
    %v544 = vadd.f32 0.0, %v543
    %v545 = vpop.f32.mrf.mxu0
    %546 = vdwg.mxu0
    %547 = vmatprep.subr.bf16.mxu0 0
    %548 = vmatpush1.bf16.msra.mxu0 0
    %549 = vmatprep.subr.bf16.mxu0 0
    %550 = vmatpush1.bf16.msra.mxu0 0
    %551 = vmatprep.subr.bf16.mxu0 0
    %552 = vmatpush1.bf16.msra.mxu0 0
    %553 = vmatprep.subr.bf16.mxu0 0
    %554 = vmatpush1.bf16.msra.mxu0 0
    %555 = vmatprep.subr.bf16.mxu0 0
    %556 = vmatpush1.bf16.msra.mxu0 0
    %557 = vmatprep.subr.bf16.mxu0 0
    %558 = vmatpush1.bf16.msra.mxu0 0
    %559 = vmatprep.subr.bf16.mxu0 0
    %560 = vmatpush1.bf16.msra.mxu0 0
    %561 = vmatprep.subr.bf16.mxu0 0
    %562 = vmatpush1.bf16.msra.mxu0 %v505
    %563 = vmatprep.subr.bf16.mxu0 0
    %564 = vmatpush2.bf16.msra.mxu0 0
    %565 = vmatprep.subr.bf16.mxu0 0
    %566 = vmatpush2.bf16.msra.mxu0 0
    %567 = vmatprep.subr.bf16.mxu0 0
    %568 = vmatpush2.bf16.msra.mxu0 0
    %569 = vmatprep.subr.bf16.mxu0 0
    %570 = vmatpush2.bf16.msra.mxu0 0
    %571 = vmatprep.subr.bf16.mxu0 0
    %572 = vmatpush2.bf16.msra.mxu0 0
    %573 = vmatprep.subr.bf16.mxu0 0
    %574 = vmatpush2.bf16.msra.mxu0 0
    %575 = vmatprep.subr.bf16.mxu0 0
    %576 = vmatpush2.bf16.msra.mxu0 0
    %577 = vmatprep.subr.bf16.mxu0 0
    %578 = vmatpush2.bf16.msra.mxu0 0
    %579 = vmatprep.mubr.bf16.mxu0 0
    %580 = vmatmul.mubr.bf16.gmra.mxu0 %v328
    %v581 = vpop.f32.mrf.mxu0
    %v582 = vadd.f32 0.0, %v581
    %v583 = vpop.f32.mrf.mxu0
    %v584 = vpop.f32.mrf.mxu0
    %v585 = vadd.f32 0.0, %v584
    %v586 = vpop.f32.mrf.mxu0
    %587 = vdwg.mxu0
    %v588 = vmax.f32 %v541, 0.0
    %v589 = vmax.f32 %v544, 0.0
    %v590 = vmax.f32 %v582, 0.0
    %v591 = vmax.f32 %v585, 0.0
    %v592 = vadd.f32 %v588, %v589
    %v593 = vadd.f32 %v592, %v590
    %v594 = vadd.f32 %v593, %v591
    %v595 = vrot.slane %v594, 4
    %v596 = vadd.f32 %v594, %v595
    %v597 = vrot.slane %v596, 2
    %v598 = vadd.f32 %v596, %v597
    %v599 = vrot.slane %v598, 1
    %v600 = vadd.f32 %v598, %v599
    %v601 = vmul.f32 %v588, %v588
    %v602 = vmul.f32 %v589, %v589
    %v603 = vmul.f32 %v590, %v590
    %v604 = vmul.f32 %v591, %v591
    %v605 = vadd.f32 %v601, %v602
    %v606 = vadd.f32 %v605, %v603
    %v607 = vadd.f32 %v606, %v604
    %v608 = vrot.slane %v607, 4
    %v609 = vadd.f32 %v607, %v608
    %v610 = vrot.slane %v609, 2
    %v611 = vadd.f32 %v609, %v610
    %v612 = vrot.slane %v611, 1
    %v613 = vadd.f32 %v611, %v612
    %v614 = vmul.f32 %v600, 0.03125
    %v615 = vmul.f32 %v613, 0.03125
    %v616 = vmul.f32 %v614, %v614
    %v617 = vsub.f32 %v615, %v616
    %v618 = vmax.f32 %v617, 0.0
    %v619 = vld [vmem:[%s7] sm:$0x1]
    %v620 = vld [vmem:[%s8] sm:$0x1]
    %v621 = vadd.f32 %v618, 1e-05
    %v622 = vrsqrt.pop %v621
    %v623 = vmul.f32 %v619, %v622
    %v624 = vmul.f32 %v614, %v623
    %v625 = vsub.f32 %v620, %v624
    %v627 = vlaneseq
    %v628 = vshrl.u32 %v627, 7
    %v629 = vsub.s32 0, %v628
    %v630 = vrot.slane %v623, %v629
    %v632 = vmul.f32 %v588, %v630
    %v633 = vmul.f32 %v589, %v630
    %v634 = vmul.f32 %v590, %v630
    %v635 = vmul.f32 %v591, %v630
    %v637 = vlaneseq
    %v638 = vshrl.u32 %v637, 7
    %v639 = vsub.s32 0, %v638
    %v640 = vrot.slane %v625, %v639
    %v642 = vadd.f32 %v632, %v640
    %v643 = vadd.f32 %v633, %v640
    %v644 = vadd.f32 %v634, %v640
    %v645 = vadd.f32 %v635, %v640
    %v646 = vpack.c.bf16 %v643, %v642
    %v647 = vpack.c.bf16 %v645, %v644
    %v648 = vld [vmem:[#allocation10] sm:$0xff]
    %v649 = vld [vmem:[#allocation10 + $0x8] sm:$0xff]
    %v650 = vld [vmem:[#allocation10 + $0x10] sm:$0xff]
    %v651 = vld [vmem:[#allocation10 + $0x18] sm:$0xff]
    %v652 = vld [vmem:[#allocation10 + $0x20] sm:$0xff]
    %v653 = vld [vmem:[#allocation10 + $0x28] sm:$0xff]
    %v654 = vld [vmem:[#allocation10 + $0x30] sm:$0xff]
    %v655 = vld [vmem:[#allocation10 + $0x38] sm:$0xff]
    %v656 = vld [vmem:[#allocation10 + $0x40] sm:$0xff]
    %v657 = vld [vmem:[#allocation10 + $0x48] sm:$0xff]
    %v658 = vld [vmem:[#allocation10 + $0x50] sm:$0xff]
    %v659 = vld [vmem:[#allocation10 + $0x58] sm:$0xff]
    %v660 = vld [vmem:[#allocation10 + $0x60] sm:$0xff]
    %v661 = vld [vmem:[#allocation10 + $0x68] sm:$0xff]
    %v662 = vld [vmem:[#allocation10 + $0x70] sm:$0xff]
    %v663 = vld [vmem:[#allocation10 + $0x78] sm:$0xff]
    %v664 = vpack.c.bf16 %v649, %v648
    %v665 = vpack.c.bf16 %v651, %v650
    %v666 = vpack.c.bf16 %v653, %v652
    %v667 = vpack.c.bf16 %v655, %v654
    %v668 = vpack.c.bf16 %v657, %v656
    %v669 = vpack.c.bf16 %v659, %v658
    %v670 = vpack.c.bf16 %v661, %v660
    %v671 = vpack.c.bf16 %v663, %v662
    %672 = vmatprep.subr.bf16.mxu0 0
    %673 = vmatpush1.bf16.msra.mxu0 %v671
    %674 = vmatprep.subr.bf16.mxu0 0
    %675 = vmatpush1.bf16.msra.mxu0 %v670
    %676 = vmatprep.subr.bf16.mxu0 0
    %677 = vmatpush1.bf16.msra.mxu0 %v669
    %678 = vmatprep.subr.bf16.mxu0 0
    %679 = vmatpush1.bf16.msra.mxu0 %v668
    %680 = vmatprep.subr.bf16.mxu0 0
    %681 = vmatpush1.bf16.msra.mxu0 %v667
    %682 = vmatprep.subr.bf16.mxu0 0
    %683 = vmatpush1.bf16.msra.mxu0 %v666
    %684 = vmatprep.subr.bf16.mxu0 0
    %685 = vmatpush1.bf16.msra.mxu0 %v665
    %686 = vmatprep.subr.bf16.mxu0 0
    %687 = vmatpush1.bf16.msra.mxu0 %v664
    %688 = vmatprep.subr.bf16.mxu0 0
    %689 = vmatpush2.bf16.msra.mxu0 0
    %690 = vmatprep.subr.bf16.mxu0 0
    %691 = vmatpush2.bf16.msra.mxu0 0
    %692 = vmatprep.subr.bf16.mxu0 0
    %693 = vmatpush2.bf16.msra.mxu0 0
    %694 = vmatprep.subr.bf16.mxu0 0
    %695 = vmatpush2.bf16.msra.mxu0 0
    %696 = vmatprep.subr.bf16.mxu0 0
    %697 = vmatpush2.bf16.msra.mxu0 0
    %698 = vmatprep.subr.bf16.mxu0 0
    %699 = vmatpush2.bf16.msra.mxu0 0
    %700 = vmatprep.subr.bf16.mxu0 0
    %701 = vmatpush2.bf16.msra.mxu0 0
    %702 = vmatprep.subr.bf16.mxu0 0
    %703 = vmatpush2.bf16.msra.mxu0 0
    %704 = vmatprep.mubr.bf16.mxu0 0
    %705 = vmatmul.mubr.bf16.gmra.mxu0 %v646
    %v706 = vpop.f32.mrf.mxu0
    %v707 = vadd.f32 0.0, %v706
    %v708 = vpop.f32.mrf.mxu0
    %v709 = vpop.f32.mrf.mxu0
    %v710 = vadd.f32 0.0, %v709
    %v711 = vpop.f32.mrf.mxu0
    %712 = vmatprep.mubr.bf16.mxu0 0
    %713 = vmatmul.mubr.bf16.gmra.mxu0 %v647
    %v714 = vpop.f32.mrf.mxu0
    %v715 = vadd.f32 0.0, %v714
    %v716 = vpop.f32.mrf.mxu0
    %v717 = vpop.f32.mrf.mxu0
    %v718 = vadd.f32 0.0, %v717
    %v719 = vpop.f32.mrf.mxu0
    %720 = vdwg.mxu0
    %v721 = vpack.c.bf16 %v710, %v707
    %v722 = vpack.c.bf16 %v718, %v715
    %723 = vmatprep.subr.bf16.mxu0 0
    %724 = vmatpush1.bf16.msra.mxu0 0
    %725 = vmatprep.subr.bf16.mxu0 0
    %726 = vmatpush1.bf16.msra.mxu0 0
    %727 = vmatprep.subr.bf16.mxu0 0
    %728 = vmatpush1.bf16.msra.mxu0 0
    %729 = vmatprep.subr.bf16.mxu0 0
    %730 = vmatpush1.bf16.msra.mxu0 0
    %731 = vmatprep.subr.bf16.mxu0 0
    %732 = vmatpush1.bf16.msra.mxu0 0
    %733 = vmatprep.subr.bf16.mxu0 0
    %734 = vmatpush1.bf16.msra.mxu0 0
    %735 = vmatprep.subr.bf16.mxu0 0
    %736 = vmatpush1.bf16.msra.mxu0 0
    %737 = vmatprep.subr.bf16.mxu0 0
    %738 = vmatpush1.bf16.msra.mxu0 %v721
    %739 = vmatprep.subr.bf16.mxu0 0
    %740 = vmatpush2.bf16.msra.mxu0 0
    %741 = vmatprep.subr.bf16.mxu0 0
    %742 = vmatpush2.bf16.msra.mxu0 0
    %743 = vmatprep.subr.bf16.mxu0 0
    %744 = vmatpush2.bf16.msra.mxu0 0
    %745 = vmatprep.subr.bf16.mxu0 0
    %746 = vmatpush2.bf16.msra.mxu0 0
    %747 = vmatprep.subr.bf16.mxu0 0
    %748 = vmatpush2.bf16.msra.mxu0 0
    %749 = vmatprep.subr.bf16.mxu0 0
    %750 = vmatpush2.bf16.msra.mxu0 0
    %751 = vmatprep.subr.bf16.mxu0 0
    %752 = vmatpush2.bf16.msra.mxu0 0
    %753 = vmatprep.subr.bf16.mxu0 0
    %754 = vmatpush2.bf16.msra.mxu0 0
    %755 = vmatprep.mubr.bf16.mxu0 0
    %756 = vmatmul.mubr.bf16.gmra.mxu0 %v284
    %v757 = vpop.f32.mrf.mxu0
    %v758 = vadd.f32 0.0, %v757
    %v759 = vpop.f32.mrf.mxu0
    %v760 = vpop.f32.mrf.mxu0
    %v761 = vadd.f32 0.0, %v760
    %v762 = vpop.f32.mrf.mxu0
    %763 = vdwg.mxu0
    %764 = vmatprep.subr.bf16.mxu0 0
    %765 = vmatpush1.bf16.msra.mxu0 0
    %766 = vmatprep.subr.bf16.mxu0 0
    %767 = vmatpush1.bf16.msra.mxu0 0
    %768 = vmatprep.subr.bf16.mxu0 0
    %769 = vmatpush1.bf16.msra.mxu0 0
    %770 = vmatprep.subr.bf16.mxu0 0
    %771 = vmatpush1.bf16.msra.mxu0 0
    %772 = vmatprep.subr.bf16.mxu0 0
    %773 = vmatpush1.bf16.msra.mxu0 0
    %774 = vmatprep.subr.bf16.mxu0 0
    %775 = vmatpush1.bf16.msra.mxu0 0
    %776 = vmatprep.subr.bf16.mxu0 0
    %777 = vmatpush1.bf16.msra.mxu0 0
    %778 = vmatprep.subr.bf16.mxu0 0
    %779 = vmatpush1.bf16.msra.mxu0 %v722
    %780 = vmatprep.subr.bf16.mxu0 0
    %781 = vmatpush2.bf16.msra.mxu0 0
    %782 = vmatprep.subr.bf16.mxu0 0
    %783 = vmatpush2.bf16.msra.mxu0 0
    %784 = vmatprep.subr.bf16.mxu0 0
    %785 = vmatpush2.bf16.msra.mxu0 0
    %786 = vmatprep.subr.bf16.mxu0 0
    %787 = vmatpush2.bf16.msra.mxu0 0
    %788 = vmatprep.subr.bf16.mxu0 0
    %789 = vmatpush2.bf16.msra.mxu0 0
    %790 = vmatprep.subr.bf16.mxu0 0
    %791 = vmatpush2.bf16.msra.mxu0 0
    %792 = vmatprep.subr.bf16.mxu0 0
    %793 = vmatpush2.bf16.msra.mxu0 0
    %794 = vmatprep.subr.bf16.mxu0 0
    %795 = vmatpush2.bf16.msra.mxu0 0
    %796 = vmatprep.mubr.bf16.mxu0 0
    %797 = vmatmul.mubr.bf16.gmra.mxu0 %v328
    %v798 = vpop.f32.mrf.mxu0
    %v799 = vadd.f32 0.0, %v798
    %v800 = vpop.f32.mrf.mxu0
    %v801 = vpop.f32.mrf.mxu0
    %v802 = vadd.f32 0.0, %v801
    %v803 = vpop.f32.mrf.mxu0
    %804 = vdwg.mxu0
    %v805 = vmax.f32 %v758, 0.0
    %v806 = vmax.f32 %v761, 0.0
    %v807 = vmax.f32 %v799, 0.0
    %v808 = vmax.f32 %v802, 0.0
    %v809 = vadd.f32 %v805, %v806
    %v810 = vadd.f32 %v809, %v807
    %v811 = vadd.f32 %v810, %v808
    %v812 = vrot.slane %v811, 4
    %v813 = vadd.f32 %v811, %v812
    %v814 = vrot.slane %v813, 2
    %v815 = vadd.f32 %v813, %v814
    %v816 = vrot.slane %v815, 1
    %v817 = vadd.f32 %v815, %v816
    %v818 = vmul.f32 %v805, %v805
    %v819 = vmul.f32 %v806, %v806
    %v820 = vmul.f32 %v807, %v807
    %v821 = vmul.f32 %v808, %v808
    %v822 = vadd.f32 %v818, %v819
    %v823 = vadd.f32 %v822, %v820
    %v824 = vadd.f32 %v823, %v821
    %v825 = vrot.slane %v824, 4
    %v826 = vadd.f32 %v824, %v825
    %v827 = vrot.slane %v826, 2
    %v828 = vadd.f32 %v826, %v827
    %v829 = vrot.slane %v828, 1
    %v830 = vadd.f32 %v828, %v829
    %v831 = vmul.f32 %v817, 0.03125
    %v832 = vmul.f32 %v830, 0.03125
    %v833 = vmul.f32 %v831, %v831
    %v834 = vsub.f32 %v832, %v833
    %v835 = vmax.f32 %v834, 0.0
    %v836 = vld [vmem:[%s9] sm:$0x1]
    %v837 = vld [vmem:[%s10] sm:$0x1]
    %v838 = vadd.f32 %v835, 1e-05
    %v839 = vrsqrt.pop %v838
    %v840 = vmul.f32 %v836, %v839
    %v841 = vmul.f32 %v831, %v840
    %v842 = vsub.f32 %v837, %v841
    %v844 = vlaneseq
    %v845 = vshrl.u32 %v844, 7
    %v846 = vsub.s32 0, %v845
    %v847 = vrot.slane %v840, %v846
    %v849 = vmul.f32 %v805, %v847
    %v850 = vmul.f32 %v806, %v847
    %v851 = vmul.f32 %v807, %v847
    %v852 = vmul.f32 %v808, %v847
    %v854 = vlaneseq
    %v855 = vshrl.u32 %v854, 7
    %v856 = vsub.s32 0, %v855
    %v857 = vrot.slane %v842, %v856
    %v859 = vadd.f32 %v849, %v857
    %v860 = vadd.f32 %v850, %v857
    %v861 = vadd.f32 %v851, %v857
    %v862 = vadd.f32 %v852, %v857
    %863 = vst [vmem:[#allocation11] sm:$0xff] %v859
    %864 = vst [vmem:[#allocation11 + $0x8] sm:$0xff] %v860
    %865 = vst [vmem:[#allocation11 + $0x10] sm:$0xff] %v861
    %866 = vst [vmem:[#allocation11 + $0x18] sm:$0xff] %v862
    // Predicated region
    $region66: #{tpu_custom_call.1} parent=1 // pred_check
      _
    $region67: #{tpu_custom_call.1} parent=1 // pred_check_branch
      %868 = sbr.rel (0) target = $region69
    $region68: #{tpu_custom_call.1} parent=1 // pred_region
      %s870 = ssub.s32 512, 512
      %871 = vsyncadd [#allocation4], %s870
      %s872 = sshll.u32 [#allocation11], 4
      %s873 = int_to_ptr.vmem [resolvable:$true] %s872
      %878 = dma.vmem_to_hbm [thread:$0]  %s873, 512, %s11, [#allocation4], 128, 128, 8
    $region69: #{tpu_custom_call.1} parent=1 // pred_fallthru
      _
    // Predicated region
    $region70: #{tpu_custom_call.1} parent=1 // pred_check
      _
    $region71: #{tpu_custom_call.1} parent=1 // pred_check_branch
      %880 = sbr.rel (0) target = $region73
    $region72: #{tpu_custom_call.1} parent=1 // pred_region
      %881 = dma.done [#allocation4], 512
    $region73: #{tpu_custom_call.1} parent=1 // pred_fallthru
      _
    %882 = vsyncpa [#allocation3], 1
    %883 = vsyncpa [#allocation6], 1
    %884 = vsyncpa [#allocation9], 1
    %885 = vsyncpa [#allocation4], 1

</llo_original>
